<compile_context>
chip_gen: v5e
topology: v5e:2x2
jax: 0.10.0
libtpu: 0.0.40
codegen_flags: <defaults>
</compile_context>

<pallas_src>
import numpy as np
import jax
import jax.numpy as jnp
from jax import lax
from jax.experimental import pallas as pl
from jax.experimental.pallas import tpu as pltpu

# ----------------------------------------------------------------------------
# Hyper-parameters: Tiny(s_time=178, s_freq=8, in_channels=4, tiny_drop=0.1)
# ----------------------------------------------------------------------------
S_TIME = 178            # sequence length fed to cnn1
S_FREQ = 8
IN_CH = 4
TINY_DROP = 0.1         # Dropout -> identity in inference

KS = S_FREQ // 2        # conv1 kernel size = 4
ST = S_FREQ // 8        # conv1 stride      = 1
OC = 512 * IN_CH        # conv1 out channels = 2048
N_BATCH = 2
W_TILE = 32             # MaxPool1d output width (25) padded up to a sublane multiple


# ----------------------------------------------------------------------------
# One-time probe: which way does pltpu.roll shift along sublanes?
# (documented as jnp.roll-compatible; verified once so the conv below is
#  correct regardless — the probe cost is hoisted setup, not per-call.)
# ----------------------------------------------------------------------------
def _roll_moves_up():
    def k(x_ref, o_ref):
        o_ref[...] = pltpu.roll(x_ref[...], 1, axis=0)

    x = jnp.arange(8, dtype=jnp.float32)[:, None] * jnp.ones((1, 128), jnp.float32)
    y = pl.pallas_call(k, out_shape=jax.ShapeDtypeStruct((8, 128), jnp.float32))(x)
    # jnp.roll semantics: row 1 of the result holds old row 0 (== 0.0).
    return bool(np.asarray(y)[1, 0] == 0.0)


# ----------------------------------------------------------------------------
# Fused kernel (single grid step, both batch elements folded into M):
#   cnn1 (Conv1d as one matmul, bias+BN folded) + ReLU + MaxPool1d(7,7)
#   cnn2/3/4 ((1,8) convs + BN folded) as tap-FMAs over XLU sublane rolls + ReLU
#   MaxPool2d((1,4), stride=(4,4)) width max (row stride-4 == channel pruning).
# ----------------------------------------------------------------------------
def _make_kernel(taps, offs, n, ock, w_final, np_roll):
    g = n * W_TILE                      # pooled rows: (batch, window) pairs

    def shift_up(y, k):
        # result[row] = y[(row + k) % g]
        return pltpu.roll(y, (g - k) if np_roll else k, axis=0)

    def kernel(lhs_ref, w_ref, o_ref):
        # cnn1 as ONE matmul; bias + BN offset live in the last weight row and
        # are matched by a ones column in the patches.  LHS rows are ordered
        # (pool-member j, batch b, window t).
        h = jnp.dot(lhs_ref[...], w_ref[...], preferred_element_type=jnp.float32)
        h = jnp.maximum(h, 0.0)                                  # (8*g, ock)

        # MaxPool1d(7,7): member 7 duplicates member 0, so the pool is 7
        # pairwise maxima of aligned 64-row slices (no misaligned sublanes).
        y = h[0:g]
        for j in range(1, 8):
            y = jnp.maximum(y, h[j * g:(j + 1) * g])             # (g, ock)
        # (post-pool ReLU is a no-op: every operand is already >= 0)

        # cnn2/3/4: 8-tap width convs with BN folded, run as tap-FMAs over
        # sublane rotations (idle VPU/XLU) instead of tiny MXU dots.  Rotation
        # wrap / cross-batch rows only ever land in rows beyond the shrinking
        # valid width (25 -> 18 -> 11 -> 4) and are never read downstream.
        for layer in range(3):
            acc = taps[layer][0] * y + offs[layer]
            for k in range(1, 8):
                acc = acc + taps[layer][k] * shift_up(y, k)
            y = jnp.maximum(acc, 0.0)

        # MaxPool2d((1,4), stride=(4,4)): the stride-4 row subsample was applied
        # up-front (channel pruning); here only the width max over w_final cols.
        rows = lax.broadcasted_iota(jnp.int32, (W_TILE, ock), 0)
        keep = rows < w_final                                    # hoisted mask
        outs = []
        for b in range(n):
            yb = y[b * W_TILE:(b + 1) * W_TILE]                  # (32, ock) aligned
            outs.append(jnp.max(jnp.where(keep, yb, 0.0), axis=0, keepdims=True))
        o_ref[...] = jnp.concatenate(outs, axis=0)               # (n, ock)

    return kernel


# ----------------------------------------------------------------------------
# Factory: one-time host-side (numpy) weight folding, returns jitted forward(x)
# ----------------------------------------------------------------------------
def make_tiny_forward(w1, b1, sc1, sh1, tail_params):
    w1 = np.asarray(w1, np.float32)
    b1 = np.asarray(b1, np.float32)
    sc1 = np.asarray(sc1, np.float32)
    sh1 = np.asarray(sh1, np.float32)
    tp = np.asarray(tail_params, np.float32)

    oc = w1.shape[0]
    ock = oc // 4                               # channels surviving MaxPool2d stride-4 rows
    kdim = w1.shape[1] * w1.shape[2]            # 16
    kcol = kdim + 1                             # + ones column for the folded bias

    # prune to surviving channels; fold conv bias + BN1d into the matmul weights
    w_k = w1[::4].reshape(ock, kdim)
    sc_k, b_k, sh_k = sc1[::4], b1[::4], sh1[::4]
    w_scaled = (w_k * sc_k[:, None]).T                           # (16, 512)
    off_row = (b_k * sc_k + sh_k)[None, :]                       # (1, 512)
    w_full = jnp.asarray(np.concatenate([w_scaled, off_row], 0))  # (17, 512)

    # cnn2/3/4 taps + offsets with BN2d folded, baked as scalar immediates
    taps = [[float(v) for v in tp[i, :8] * tp[i, 9]] for i in range(3)]
    offs = [float(tp[i, 8] * tp[i, 9] + tp[i, 10]) for i in range(3)]

    np_roll = _roll_moves_up()

    @jax.jit
    def forward(x):
        c, n, length = x.shape
        assert ST == 1
        l1 = (length - KS) // ST + 1             # 175
        l2 = l1 // 7                             # 25 = MaxPool1d output width
        w_final = l2 - 21                        # 4  = width after cnn2/3/4
        assert w_final == 4 and l2 <= W_TILE
        m = 8 * n * W_TILE                       # 512 head matmul rows

        # --- x-dependent glue: im2col ordered (member j, batch b, window t) ---
        xn = jnp.transpose(x, (1, 0, 2))                                   # (n, c, L)
        p = jnp.stack([xn[:, :, k:k + l1] for k in range(KS)], axis=-1)    # (n,c,l1,KS)
        p = jnp.transpose(p, (0, 2, 1, 3)).reshape(n, l1, kdim)            # (n,l1,16)
        p = p[:, :7 * l2].reshape(n, l2, 7, kdim)                          # (n,25,7,16)
        p = jnp.concatenate([p, p[:, :, :1, :]], axis=2)                   # dup member 0 -> 8
        p = jnp.concatenate([p, jnp.ones(p.shape[:3] + (1,), p.dtype)], -1)  # bias ones col
        p = jnp.pad(p, ((0, 0), (0, W_TILE - l2), (0, 0), (0, 0)))         # pad 25->32 windows
        lhs = jnp.transpose(p, (2, 0, 1, 3)).reshape(m, kcol)              # (512, 17)

        kernel = _make_kernel(taps, offs, n, ock, w_final, np_roll)
        out = pl.pallas_call(
            kernel,
            out_shape=jax.ShapeDtypeStruct((n, ock), jnp.float32),
            grid=(1,),
            in_specs=[
                pl.BlockSpec((m, kcol), lambda i: (0, 0)),
                pl.BlockSpec((kcol, ock), lambda i: (0, 0)),
            ],
            out_specs=pl.BlockSpec((n, ock), lambda i: (0, 0)),
            compiler_params=pltpu.CompilerParams(
                dimension_semantics=("arbitrary",)),
            cost_estimate=pl.CostEstimate(
                flops=2 * m * kcol * ock + 2 * 3 * 8 * n * W_TILE * ock,
                transcendentals=0,
                bytes_accessed=4 * (m * kcol + kcol * ock + n * ock)),
        )(lhs, w_full)                                                     # (n, 512)

        # torch.flatten(start_dim=1) then reshape(N, in_channels, -1)
        return out.reshape(n, -1).reshape(n, c, -1)                        # (n, 4, 128)

    return forward


# ----------------------------------------------------------------------------
# Pure-JAX reference (full, unpruned path) for self-check
# ----------------------------------------------------------------------------
def reference_forward(x, w1, b1, sc1, sh1, tail_params):
    c, n, _ = x.shape
    oc = w1.shape[0]
    xn = jnp.transpose(x, (1, 0, 2))
    z = lax.conv_general_dilated(
        xn, w1, window_strides=(ST,), padding="VALID",
        dimension_numbers=("NCH", "OIH", "NCH"),
        precision=lax.Precision.HIGHEST)
    z = z + b1[None, :, None]
    z = z * sc1[None, :, None] + sh1[None, :, None]
    z = jnp.maximum(z, 0.0)
    l1 = z.shape[2]
    l2 = l1 // 7
    z = z[:, :, :7 * l2].reshape(n, oc, l2, 7).max(axis=3)
    z = jnp.maximum(z, 0.0)
    for layer in range(3):
        w = tail_params[layer, :8]
        b = tail_params[layer, 8]
        sc = tail_params[layer, 9]
        sh = tail_params[layer, 10]
        w_out = z.shape[2] - 7
        acc = sum(z[:, :, k:k + w_out] * w[k] for k in range(8)) + b
        z = jnp.maximum(acc * sc + sh, 0.0)
    wdt = z.shape[2]
    wp = (wdt - 4) // 4 + 1
    z = z[:, ::4, :]
    z = jnp.stack([z[:, :, 4 * w:4 * w + 4].max(axis=2) for w in range(wp)], axis=2)
    z = jnp.maximum(z, 0.0)
    return z.reshape(n, -1).reshape(n, c, -1)


if __name__ == "__main__":
    key = jax.random.PRNGKey(0)
    k = jax.random.split(key, 12)

    x = jax.random.normal(k[0], (IN_CH, N_BATCH, S_TIME), jnp.float32)

    # cnn1: Conv1d(IN_CH -> 512*IN_CH, kernel=KS, stride=ST) + BatchNorm1d (eval)
    w1 = jax.random.normal(k[1], (OC, IN_CH, KS), jnp.float32) / np.sqrt(IN_CH * KS)
    b1 = 0.05 * jax.random.normal(k[2], (OC,), jnp.float32)
    g1 = 1.0 + 0.1 * jax.random.normal(k[3], (OC,), jnp.float32)
    be1 = 0.05 * jax.random.normal(k[4], (OC,), jnp.float32)
    rm1 = 0.05 * jax.random.normal(k[5], (OC,), jnp.float32)
    rv1 = 0.5 + jax.random.uniform(k[6], (OC,), jnp.float32)
    sc1 = g1 / jnp.sqrt(rv1 + 1e-5)
    sh1 = be1 - rm1 * sc1

    # cnn2/3/4: (1,8) single-channel convs + BatchNorm2d(1) (eval)
    tail_rows = []
    for i in range(3):
        kk = jax.random.split(k[7 + i], 6)
        w = jax.random.normal(kk[0], (8,), jnp.float32) / np.sqrt(8.0)
        b = 0.05 * jax.random.normal(kk[1], (), jnp.float32)
        gamma = 1.0 + 0.1 * jax.random.normal(kk[2], (), jnp.float32)
        beta = 0.05 * jax.random.normal(kk[3], (), jnp.float32)
        mean = 0.05 * jax.random.normal(kk[4], (), jnp.float32)
        var = 0.5 + jax.random.uniform(kk[5], (), jnp.float32)
        scale = gamma / jnp.sqrt(var + 1e-5)
        shift = beta - mean * scale
        tail_rows.append(jnp.concatenate([w, b[None], scale[None], shift[None]]))
    tail_params = jnp.stack(tail_rows).astype(jnp.float32)      # (3, 11)

    forward = make_tiny_forward(np.asarray(w1), np.asarray(b1), np.asarray(sc1),
                                np.asarray(sh1), np.asarray(tail_params))
    out = jax.block_until_ready(forward(x))

    ref = reference_forward(x, w1, b1, sc1, sh1, tail_params)
    assert out.shape == (N_BATCH, IN_CH, 128), out.shape
    np.testing.assert_allclose(np.asarray(out), np.asarray(ref), rtol=2e-3, atol=2e-3)
    print("KERNEL_OK")
</pallas_src>

<mosaic_0001>
module attributes {stable_mosaic.version = 11 : i64} {
  func.func @k(%arg0: memref<8x128xf32, #tpu.memory_space<vmem>>, %arg1: memref<8x128xf32, #tpu.memory_space<vmem>>) attributes {dimension_semantics = [], scalar_prefetch = 0 : i64, scratch_operands = 0 : i64, tpu.core_type = #tpu.core_type<tc>} {
    %c0 = arith.constant 0 : index
    %c0_0 = arith.constant 0 : index
    %0 = vector.load %arg0[%c0, %c0_0] : memref<8x128xf32, #tpu.memory_space<vmem>>, vector<8x128xf32>
    %c1_i32 = arith.constant 1 : i32
    %1 = tpu.dynamic_rotate %0 by %c1_i32 dim 0 : vector<8x128xf32>, i32 -> vector<8x128xf32>
    %c0_1 = arith.constant 0 : index
    %c0_2 = arith.constant 0 : index
    %2 = vector.load %arg1[%c0_1, %c0_2] : memref<8x128xf32, #tpu.memory_space<vmem>>, vector<8x128xf32>
    tpu.vector_store %arg1[%c0_1, %c0_2], %1 {strides = array<i32>} : memref<8x128xf32, #tpu.memory_space<vmem>>, vector<8x128xf32>,
    return
  }
}

</mosaic_0001>

<llo_original>
// kernel: tpu_custom_call.1
$region0: #{tpu_custom_call.1}
  #allocation0 [shape = 'u32[]', space=smem, size = 0x4, offset = 0x4, fixed_abs, tag = 'smem constant byte address 0x4 - core index']
  #allocation1 [shape = 'u32[72,128]{1,0:T(1,128)}', space=vmem, size = 0x9000, scoped, tag = 'internal scratch']
  %s0 = inlined_call_operand.hbm [shape: f32[8,128], index: 0, kind: input, shape index: {}]
  %s1 = inlined_call_operand.hbm [shape: f32[8,128], index: 1, kind: output, shape index: {}]
  %s2 = sld [smem:[#allocation0]]
  $region18: #{tpu_custom_call.1} parent=0
    _
  %s4 = ssub.s32 1, %s2
  %s5 = scalar_select 0, %s4, %s2
  $region1: #{tpu_custom_call.1} parent=0
    #allocation2 [shape = 'u8[4096]{0}', space=vmem, size = 0x1000, scoped, tag = 'input window, operand 0, single buffered']
    #allocation3 [shape = 's32[1]{0}', space=sflag, size = 0x4, scoped, tag = 'scoped memory for tpu_custom_call.1']
    #allocation4 [shape = 's32[1]{0}', space=sflag, size = 0x4, scoped, tag = 'scoped memory for tpu_custom_call.1']
    #allocation5 [shape = 'u8[4096]{0}', space=vmem, size = 0x1000, scoped, tag = 'output window, operand 0, single buffered']
    %6 = vsyncpa [#allocation3], 0
    %7 = vsyncpa [#allocation4], 0
    // Predicated region
    $region2: #{tpu_custom_call.1} parent=1 // pred_check
      _
    $region3: #{tpu_custom_call.1} parent=1 // pred_check_branch
      %9 = sbr.rel (0) target = $region5
    $region4: #{tpu_custom_call.1} parent=1 // pred_region
      %11 = vsyncadd [#allocation3], 0
      %s13 = sshll.u32 %s0, 4
      %s14 = int_to_ptr.hbm [resolvable:$true] %s13
      %s15 = sshll.u32 [#allocation2], 4
      %s16 = int_to_ptr.vmem [resolvable:$true] %s15
      %18 = dma.hbm_to_vmem [thread:$0]  %s14, 128, %s16, [#allocation3]
    $region5: #{tpu_custom_call.1} parent=1 // pred_fallthru
      _
    // Predicated region
    $region6: #{tpu_custom_call.1} parent=1 // pred_check
      _
    $region7: #{tpu_custom_call.1} parent=1 // pred_check_branch
      %20 = sbr.rel (0) target = $region9
    $region8: #{tpu_custom_call.1} parent=1 // pred_region
      %22 = dma.done [#allocation3], 128
    $region9: #{tpu_custom_call.1} parent=1 // pred_fallthru
      _
    %v23 = vld [vmem:[#allocation2] sm:$0xff]
    %v24 = vrot.slane %v23, 7
    %25 = vst [vmem:[#allocation5] sm:$0xff] %v24
    // Predicated region
    $region10: #{tpu_custom_call.1} parent=1 // pred_check
      _
    $region11: #{tpu_custom_call.1} parent=1 // pred_check_branch
      %27 = sbr.rel (0) target = $region13
    $region12: #{tpu_custom_call.1} parent=1 // pred_region
      %29 = vsyncadd [#allocation4], 0
      %s31 = sshll.u32 [#allocation5], 4
      %s32 = int_to_ptr.vmem [resolvable:$true] %s31
      %s33 = sshll.u32 %s1, 4
      %s34 = int_to_ptr.hbm [resolvable:$true] %s33
      %36 = dma.vmem_to_hbm [thread:$0]  %s32, 128, %s34, [#allocation4]
    $region13: #{tpu_custom_call.1} parent=1 // pred_fallthru
      _
    // Predicated region
    $region14: #{tpu_custom_call.1} parent=1 // pred_check
      _
    $region15: #{tpu_custom_call.1} parent=1 // pred_check_branch
      %38 = sbr.rel (0) target = $region17
    $region16: #{tpu_custom_call.1} parent=1 // pred_region
      %40 = dma.done [#allocation4], 128
    $region17: #{tpu_custom_call.1} parent=1 // pred_fallthru
      _
    %41 = vsyncpa [#allocation3], 1
    %42 = vsyncpa [#allocation4], 1

</llo_original>
